<compile_context>
chip_gen: v7x
topology: tpu7x:2x2x1
jax: 0.10.0
libtpu: 0.0.40
codegen_flags: <defaults>
</compile_context>

<pallas_src>
import jax
import jax.numpy as jnp
from jax.experimental import pallas as pl
from jax.experimental.pallas import tpu as pltpu


def _round_up(x: int, m: int) -> int:
    return ((x + m - 1) // m) * m


def _cdiv(a: int, b: int) -> int:
    return (a + b - 1) // b


# --------------------------------------------------------------------------- #
# Kernel
# --------------------------------------------------------------------------- #
def _mlp_kernel(x_ref, w1_ref, b1_ref, w2_ref, b2_ref, o_ref, acc_ref):
    # x_ref : (tm, d_model)      w1_ref: (d_model, tk)   b1_ref: (1, tk)   f32
    # w2_ref: (tk, N_pad)        b2_ref: (1, N_pad) f32
    # o_ref : (tm, N_pad)        acc_ref: (tm, N_pad) f32 scratch
    k = pl.program_id(1)

    @pl.when(k == 0)
    def _init():
        # Seed the accumulator with b2 (added exactly once).
        acc_ref[...] = jnp.broadcast_to(b2_ref[...], acc_ref.shape)

    # First matmul chunk on the MXU, f32 accumulation, native-dtype operands.
    h = jnp.dot(x_ref[...], w1_ref[...], preferred_element_type=jnp.float32)
    # Bias per d_mlp chunk (each hidden unit sees its bias exactly once) + ReLU.
    h = jnp.maximum(h + b1_ref[...], 0.0)
    # Second matmul chunk: accumulate into the resident f32 output accumulator.
    acc_ref[...] += jnp.dot(h.astype(w2_ref.dtype), w2_ref[...],
                            preferred_element_type=jnp.float32)

    @pl.when(k == pl.num_programs(1) - 1)
    def _finalize():
        o_ref[...] = acc_ref[...].astype(o_ref.dtype)


# --------------------------------------------------------------------------- #
# VMEM-budget-driven tile selection
# --------------------------------------------------------------------------- #
def _select_tiles(M, d_model, d_mlp, num_classes, x_bytes, w_bytes, out_bytes):
    try:
        phys = int(pltpu.get_tpu_info().vmem_capacity_bytes)
    except Exception:
        phys = 64 * 1024 * 1024  # conservative (v7x per-TC) fallback

    # 128 MiB -> 112 MiB limit, 64 MiB -> 56 MiB limit.
    vmem_limit = phys - max(8 * 1024 * 1024, phys // 8)
    budget = int(vmem_limit * 0.85)  # headroom for compiler-internal scratch

    N_pad = _round_up(num_classes, 128)
    d_mlp_pad = _round_up(d_mlp, 128)
    # tk candidates: multiples of 128 that divide d_mlp_pad (descending) so the
    # reduction grid tiles d_mlp exactly and weight padding is a no-op.
    tk_cands = [t for t in range(d_mlp_pad, 127, -128) if d_mlp_pad % t == 0]

    # Row tiling: balanced tiles; cap driven by the VMEM share for x (2 bufs).
    M_r8 = _round_up(M, 8)
    tm_cap = int((budget * 2 // 5) // (2 * d_model * x_bytes))
    tm_cap = min(max(8, (tm_cap // 8) * 8), 1024)
    n_row = max(1, _cdiv(M_r8, tm_cap))
    if n_row == 1 and M_r8 >= 16 and phys <= 80 * 1024 * 1024:
        # v7x-like part: give the second TensorCore a row tile to work on.
        n_row = 2
    tm = _round_up(_cdiv(M, n_row), 8)

    def usage(tm_, tk_, w1_bufs=2):
        return (2 * tm_ * d_model * x_bytes            # x (double-buffered)
                + w1_bufs * d_model * tk_ * w_bytes    # W1 chunk
                + 2 * tk_ * N_pad * w_bytes            # W2 chunk
                + 2 * 8 * tk_ * 4 + 2 * 8 * N_pad * 4  # b1/b2 (sublane-padded)
                + 2 * tm_ * N_pad * out_bytes          # output tile
                + tm_ * N_pad * 4)                     # f32 accumulator

    tk = None
    while True:
        for cand in tk_cands:
            if usage(tm, cand) <= budget:
                tk = cand
                break
        if tk is not None or tm <= 8:
            break
        # Even tk=128 doesn't fit with this row tile: shrink the row tile.
        n_row += 1
        tm = _round_up(_cdiv(M, n_row), 8)
    if tk is None:
        tk = 128  # last resort; stays correct, compiler may spill

    M_pad = tm * n_row
    k_steps = d_mlp_pad // tk
    w1_bufs = 3 if (k_steps >= 3 and usage(tm, tk, 3) <= budget) else 2
    return tm, tk, M_pad, N_pad, d_mlp_pad, w1_bufs, int(vmem_limit)


# --------------------------------------------------------------------------- #
# Wrapper
# --------------------------------------------------------------------------- #
def nonlinear_probe_forward(x, w1, b1, w2, b2, *, compute_dtype=None):
    """x: [..., d_model] -> [..., num_classes] (fused MLP probe, eval mode).

    Weights use [in_features, out_features] layout (== PyTorch nn.Linear weight.T).
    compute_dtype=jnp.bfloat16 enables the MXU-native mixed-precision path
    (f32 accumulation, f32 biases); default keeps the input dtype.
    """
    orig_shape = x.shape
    d_model = orig_shape[-1]
    d_mlp = w1.shape[1]
    num_classes = w2.shape[1]
    out_dtype = x.dtype

    cdt = jnp.dtype(compute_dtype) if compute_dtype is not None else jnp.dtype(x.dtype)
    x2d = x.reshape(-1, d_model).astype(cdt)
    w1c = w1.astype(cdt)
    w2c = w2.astype(cdt)
    M = x2d.shape[0]

    tm, tk, M_pad, N_pad, d_mlp_pad, w1_bufs, vmem_limit = _select_tiles(
        M, d_model, d_mlp, num_classes,
        cdt.itemsize, cdt.itemsize, jnp.dtype(out_dtype).itemsize)

    # ---- Padding (all no-ops for the common divisible shapes) ---------------
    if M_pad != M:
        x2d = jnp.pad(x2d, ((0, M_pad - M), (0, 0)))
    if d_mlp_pad != d_mlp:
        # Zero-padded hidden units are exact: ReLU(0 + 0) = 0 through zero W2 rows.
        w1c = jnp.pad(w1c, ((0, 0), (0, d_mlp_pad - d_mlp)))
        b1 = jnp.pad(b1, ((0, d_mlp_pad - d_mlp),))
        w2c = jnp.pad(w2c, ((0, d_mlp_pad - d_mlp), (0, 0)))
    if N_pad != num_classes:
        # Lane-dense output: zero class columns sliced off below.
        w2c = jnp.pad(w2c, ((0, 0), (0, N_pad - num_classes)))
        b2 = jnp.pad(b2, ((0, N_pad - num_classes),))
    b1_p = b1.reshape(1, d_mlp_pad).astype(jnp.float32)
    b2_p = b2.reshape(1, N_pad).astype(jnp.float32)

    grid = (M_pad // tm, d_mlp_pad // tk)

    # W1 is the long-pole DMA per step; triple-buffer it when headroom allows.
    w1_spec = pl.BlockSpec((d_model, tk), lambda i, k: (0, k))
    if w1_bufs == 3:
        try:
            w1_spec = pl.BlockSpec((d_model, tk), lambda i, k: (0, k),
                                   pipeline_mode=pl.Buffered(3))
        except TypeError:
            pass  # older BlockSpec without pipeline_mode: keep default depth 2

    out = pl.pallas_call(
        _mlp_kernel,
        out_shape=jax.ShapeDtypeStruct((M_pad, N_pad), out_dtype),
        grid_spec=pltpu.PrefetchScalarGridSpec(
            num_scalar_prefetch=0,
            grid=grid,
            in_specs=[
                pl.BlockSpec((tm, d_model), lambda i, k: (i, 0)),   # x rows
                w1_spec,                                            # W1 chunk
                pl.BlockSpec((1, tk), lambda i, k: (0, k)),         # b1 chunk
                pl.BlockSpec((tk, N_pad), lambda i, k: (k, 0)),     # W2 chunk
                pl.BlockSpec((1, N_pad), lambda i, k: (0, 0)),      # b2
            ],
            out_specs=pl.BlockSpec((tm, N_pad), lambda i, k: (i, 0)),
            scratch_shapes=[pltpu.VMEM((tm, N_pad), jnp.float32)],
        ),
        compiler_params=pltpu.CompilerParams(
            dimension_semantics=("parallel", "arbitrary"),
            vmem_limit_bytes=vmem_limit,
        ),
    )(x2d, w1c, b1_p, w2c, b2_p)

    out = out[:M, :num_classes]
    return out.reshape(*orig_shape[:-1], num_classes)


# --------------------------------------------------------------------------- #
# Self-test
# --------------------------------------------------------------------------- #
if __name__ == "__main__":
    batch, seq = 2, 8
    d_model, d_mlp, num_classes = 32, 512, 16

    key = jax.random.PRNGKey(0)
    kx, k1, k2, k3, k4 = jax.random.split(key, 5)

    x = jax.random.normal(kx, (batch, seq, d_model), dtype=jnp.float32)

    lim1 = 1.0 / jnp.sqrt(d_model)
    lim2 = 1.0 / jnp.sqrt(d_mlp)
    w1 = jax.random.uniform(k1, (d_model, d_mlp), minval=-lim1, maxval=lim1,
                            dtype=jnp.float32)
    b1 = jax.random.uniform(k2, (d_mlp,), minval=-lim1, maxval=lim1,
                            dtype=jnp.float32)
    w2 = jax.random.uniform(k3, (d_mlp, num_classes), minval=-lim2, maxval=lim2,
                            dtype=jnp.float32)
    b2 = jax.random.uniform(k4, (num_classes,), minval=-lim2, maxval=lim2,
                            dtype=jnp.float32)

    # Full-precision path: exact vs. plain-JAX reference (eval-mode dropout = id).
    y = nonlinear_probe_forward(x, w1, b1, w2, b2)
    y = jax.block_until_ready(y)

    ref = jnp.maximum(x.reshape(-1, d_model) @ w1 + b1, 0.0) @ w2 + b2
    ref = ref.reshape(batch, seq, num_classes)
    assert y.shape == (batch, seq, num_classes)
    assert jnp.allclose(y, ref, atol=1e-4, rtol=1e-4)

    # bf16 mixed-precision path: exercise the MXU-native flag (looser semantics).
    y_bf16 = nonlinear_probe_forward(x, w1, b1, w2, b2,
                                     compute_dtype=jnp.bfloat16)
    y_bf16 = jax.block_until_ready(y_bf16)
    assert y_bf16.shape == (batch, seq, num_classes)
    assert bool(jnp.all(jnp.isfinite(y_bf16)))

    print("KERNEL_OK")
</pallas_src>

<mosaic_0001>
module attributes {stable_mosaic.version = 11 : i64} {
  func.func @_mlp_kernel(%arg0: i32, %arg1: i32, %arg2: memref<8x32xf32, #tpu.memory_space<vmem>>, %arg3: memref<32x512xf32, #tpu.memory_space<vmem>>, %arg4: memref<1x512xf32, #tpu.memory_space<vmem>>, %arg5: memref<512x128xf32, #tpu.memory_space<vmem>>, %arg6: memref<1x128xf32, #tpu.memory_space<vmem>>, %arg7: memref<8x128xf32, #tpu.memory_space<vmem>>, %arg8: memref<8x128xf32, #tpu.memory_space<vmem>>) attributes {dimension_semantics = [#tpu.dimension_semantics<parallel>, #tpu.dimension_semantics<arbitrary>], iteration_bounds = array<i64: 2, 1>, scalar_prefetch = 0 : i64, scratch_operands = 1 : i64, tpu.core_type = #tpu.core_type<tc>, window_params = [{transform_indices = @transform_0, window_bounds = array<i64: 8, 32>}, {transform_indices = @transform_1, window_bounds = array<i64: 32, 512>}, {transform_indices = @transform_2, window_bounds = array<i64: 1, 512>}, {transform_indices = @transform_3, window_bounds = array<i64: 512, 128>}, {pipeline_mode = #tpu.pipeline_mode<synchronous>, transform_indices = @transform_4, window_bounds = array<i64: 1, 128>}, {transform_indices = @transform_5, window_bounds = array<i64: 8, 128>}]} {
    %c0_i32 = arith.constant 0 : i32
    %0 = arith.cmpi eq, %arg1, %c0_i32 : i32
    %1 = arith.extui %0 : i1 to i32
    %c0_i32_0 = arith.constant 0 : i32
    %2 = arith.cmpi ne, %1, %c0_i32_0 : i32
    scf.if %2 {
      %c0_16 = arith.constant 0 : index
      %c0_17 = arith.constant 0 : index
      %19 = vector.load %arg6[%c0_16, %c0_17] : memref<1x128xf32, #tpu.memory_space<vmem>>, vector<1x128xf32>
      %20 = vector.shape_cast %19 : vector<1x128xf32> to vector<1x128xf32>
      %21 = vector.broadcast %20 : vector<1x128xf32> to vector<8x128xf32>
      %c0_18 = arith.constant 0 : index
      %c0_19 = arith.constant 0 : index
      %22 = vector.load %arg8[%c0_18, %c0_19] : memref<8x128xf32, #tpu.memory_space<vmem>>, vector<8x128xf32>
      tpu.vector_store %arg8[%c0_18, %c0_19], %21 {strides = array<i32>} : memref<8x128xf32, #tpu.memory_space<vmem>>, vector<8x128xf32>,
    } else {
    }
    %c0 = arith.constant 0 : index
    %c0_1 = arith.constant 0 : index
    %3 = vector.load %arg2[%c0, %c0_1] : memref<8x32xf32, #tpu.memory_space<vmem>>, vector<8x32xf32>
    %c0_2 = arith.constant 0 : index
    %c0_3 = arith.constant 0 : index
    %4 = vector.load %arg3[%c0_2, %c0_3] : memref<32x512xf32, #tpu.memory_space<vmem>>, vector<32x512xf32>
    %cst = arith.constant dense<0.000000e+00> : vector<8x512xf32>
    %5 = tpu.matmul %3, %4, %cst {dimension_numbers = #tpu.dot_dimension_numbers<[1], [0], [0], [1], [0, 0, 1, 1], [], []>} : vector<8x32xf32>, vector<32x512xf32>, vector<8x512xf32> -> vector<8x512xf32>
    %c0_4 = arith.constant 0 : index
    %c0_5 = arith.constant 0 : index
    %6 = vector.load %arg4[%c0_4, %c0_5] : memref<1x512xf32, #tpu.memory_space<vmem>>, vector<1x512xf32>
    %7 = vector.broadcast %6 : vector<1x512xf32> to vector<8x512xf32>
    %8 = arith.addf %5, %7 : vector<8x512xf32>
    %cst_6 = arith.constant 0.000000e+00 : f32
    %9 = vector.broadcast %cst_6 : f32 to vector<8x512xf32>
    %10 = arith.maximumf %8, %9 : vector<8x512xf32>
    %c0_7 = arith.constant 0 : index
    %c0_8 = arith.constant 0 : index
    %11 = vector.load %arg8[%c0_7, %c0_8] : memref<8x128xf32, #tpu.memory_space<vmem>>, vector<8x128xf32>
    %c0_9 = arith.constant 0 : index
    %c0_10 = arith.constant 0 : index
    %12 = vector.load %arg5[%c0_9, %c0_10] : memref<512x128xf32, #tpu.memory_space<vmem>>, vector<512x128xf32>
    %cst_11 = arith.constant dense<0.000000e+00> : vector<8x128xf32>
    %13 = tpu.matmul %10, %12, %cst_11 {dimension_numbers = #tpu.dot_dimension_numbers<[1], [0], [0], [1], [0, 0, 1, 1], [], []>} : vector<8x512xf32>, vector<512x128xf32>, vector<8x128xf32> -> vector<8x128xf32>
    %14 = arith.addf %11, %13 : vector<8x128xf32>
    %c0_12 = arith.constant 0 : index
    %c0_13 = arith.constant 0 : index
    %15 = vector.load %arg8[%c0_12, %c0_13] : memref<8x128xf32, #tpu.memory_space<vmem>>, vector<8x128xf32>
    tpu.vector_store %arg8[%c0_12, %c0_13], %14 {strides = array<i32>} : memref<8x128xf32, #tpu.memory_space<vmem>>, vector<8x128xf32>,
    %c0_i32_14 = arith.constant 0 : i32
    %16 = arith.cmpi eq, %arg1, %c0_i32_14 : i32
    %17 = arith.extui %16 : i1 to i32
    %c0_i32_15 = arith.constant 0 : i32
    %18 = arith.cmpi ne, %17, %c0_i32_15 : i32
    scf.if %18 {
      %c0_16 = arith.constant 0 : index
      %c0_17 = arith.constant 0 : index
      %19 = vector.load %arg8[%c0_16, %c0_17] : memref<8x128xf32, #tpu.memory_space<vmem>>, vector<8x128xf32>
      %c0_18 = arith.constant 0 : index
      %c0_19 = arith.constant 0 : index
      %20 = vector.load %arg7[%c0_18, %c0_19] : memref<8x128xf32, #tpu.memory_space<vmem>>, vector<8x128xf32>
      tpu.vector_store %arg7[%c0_18, %c0_19], %19 {strides = array<i32>} : memref<8x128xf32, #tpu.memory_space<vmem>>, vector<8x128xf32>,
    } else {
    }
    return
  }
  func.func @transform_0(%arg0: i32, %arg1: i32) -> (i32, i32) {
    %c0_i32 = arith.constant 0 : i32
    %c0_i32_0 = arith.constant 0 : i32
    return %arg0, %c0_i32 : i32, i32
  }
  func.func @transform_1(%arg0: i32, %arg1: i32) -> (i32, i32) {
    %c0_i32 = arith.constant 0 : i32
    %c0_i32_0 = arith.constant 0 : i32
    return %c0_i32, %arg1 : i32, i32
  }
  func.func @transform_2(%arg0: i32, %arg1: i32) -> (i32, i32) {
    %c0_i32 = arith.constant 0 : i32
    %c0_i32_0 = arith.constant 0 : i32
    return %c0_i32, %arg1 : i32, i32
  }
  func.func @transform_3(%arg0: i32, %arg1: i32) -> (i32, i32) {
    %c0_i32 = arith.constant 0 : i32
    %c0_i32_0 = arith.constant 0 : i32
    return %arg1, %c0_i32 : i32, i32
  }
  func.func @transform_4(%arg0: i32, %arg1: i32) -> (i32, i32) {
    %c0_i32 = arith.constant 0 : i32
    %c0_i32_0 = arith.constant 0 : i32
    %c0_i32_1 = arith.constant 0 : i32
    return %c0_i32, %c0_i32_0 : i32, i32
  }
  func.func @transform_5(%arg0: i32, %arg1: i32) -> (i32, i32) {
    %c0_i32 = arith.constant 0 : i32
    %c0_i32_0 = arith.constant 0 : i32
    return %arg0, %c0_i32 : i32, i32
  }
}

</mosaic_0001>

<llo_original>
// kernel: tpu_custom_call.1
$region0: #{tpu_custom_call.1}
  #allocation0 [shape = 'u32[]', space=smem, size = 0x4, offset = 0x4, fixed_abs, tag = 'smem constant byte address 0x4 - core index']
  #allocation1 [shape = 'u32[144,128]{1,0:T(1,128)}', space=vmem, size = 0x12000, scoped, tag = 'internal scratch']
  #allocation2 [shape = 'f32[8,128]{1,0:T(8,128)}', space=vmem, size = 0x1000, scoped, tag = 'scratch operand']
  %s0 = inlined_call_operand.hbm [shape: f32[16,32], index: 0, kind: input, shape index: {}]
  %s1 = inlined_call_operand.hbm [shape: f32[32,512], index: 1, kind: input, shape index: {}]
  %s2 = inlined_call_operand.vmem [shape: f32[1,512], index: 2, kind: input, shape index: {}]
  %s3 = inlined_call_operand.hbm [shape: f32[512,128], index: 3, kind: input, shape index: {}]
  %s4 = inlined_call_operand.vmem [shape: f32[1,128], index: 4, kind: input, shape index: {}]
  %s5 = inlined_call_operand.hbm [shape: f32[16,128], index: 5, kind: output, shape index: {}]
  %s6 = sld [smem:[#allocation0]]
  $region73: #{tpu_custom_call.1} parent=0
    _
  %s8 = ssub.s32 1, %s6
  %s9 = scalar_select 0, %s8, %s6
  $region1: #{tpu_custom_call.1} parent=0
    #allocation3 [shape = 'u8[8192]{0}', space=vmem, size = 0x2000, scoped, tag = 'input window, operand 0']
    #allocation4 [shape = 's32[2]{0}', space=sflag, size = 0x8, scoped, tag = 'scoped memory for tpu_custom_call.1']
    #allocation5 [shape = 's32[2]{0}', space=sflag, size = 0x8, scoped, tag = 'scoped memory for tpu_custom_call.1']
    #allocation6 [shape = 'u8[65536]{0}', space=vmem, size = 0x10000, scoped, tag = 'input window, operand 1, single buffered']
    #allocation7 [shape = 's32[1]{0}', space=sflag, size = 0x4, scoped, tag = 'scoped memory for tpu_custom_call.1']
    #allocation8 [shape = 'u8[262144]{0}', space=vmem, size = 0x40000, scoped, tag = 'input window, operand 3, single buffered']
    #allocation9 [shape = 'u8[8192]{0}', space=vmem, size = 0x2000, scoped, tag = 'output window, operand 0']
    %10 = vsyncpa [#allocation4], 0
    %s11 = scalar_lea.sflag [#allocation4], 1
    %12 = vsyncpa %s11, 0
    %13 = vsyncpa [#allocation7], 0
    %14 = vsyncpa [#allocation5], 0
    %s15 = scalar_lea.sflag [#allocation5], 1
    %16 = vsyncpa %s15, 0
    loop: start=0, step=1, limit=4
    $region2: #{tpu_custom_call.1} parent=1 // loop_pre_header
      _
    $region3: #{tpu_custom_call.1} parent=1 // loop_header
      %s18 = sphi 0, %s22
      %p19 = scmp.ge.s32.totalorder %s18, 4
      %s25 = sphi 0, %s37
      %s26 = sphi 0, %s33
      %s27 = sphi 0, %s25
      %s28 = sphi 0, %s26
      %s29 = sphi 0, %s27
      %s30 = sphi 0, %s28
      %s40 = sphi 0, %s42
      %s43 = sphi 0, %s40
      %s44 = sphi 0, %s43
      %s60 = sphi 0, %s44
      %s66 = sphi 0, %s68
      %s69 = sphi 0, %s66
      %s70 = sphi 0, %s69
      %s86 = sphi 0, %s70
      %s92 = sphi 0, %s94
      %s95 = sphi 0, %s92
      %s96 = sphi 0, %s95
      %s112 = sphi 0, %s96
      %s118 = sphi 0, %s120
      %s121 = sphi 0, %s118
      %s122 = sphi 0, %s121
      %s138 = sphi 0, %s122
      %s142 = sphi 0, %s142
      %s144 = sphi 0, %s142
      %s145 = sphi 0, %s144
      %s159 = sphi 0, %s145
      %s165 = sphi 0, %s167
      %s168 = sphi 0, %s165
      %s169 = sphi 0, %s168
      %s185 = sphi 0, %s169
    $region4: #{tpu_custom_call.1} parent=1 // loop_header_branch
      %21 = sbr.rel (%p19) target = $region8
    $region5: #{tpu_custom_call.1} parent=1 // loop_body
      %s23 = ssub.s32 %s18, 1
      %s24 = ssub.s32 %s18, 2
      %s31 = sadd.s32 1, %s26
      %p32 = scmp.ge.s32.totalorder %s31, 1
      %s33 = scalar_select %p32, 0, %s31
      %s34 = sadd.s32 1, %s25
      %s35 = scalar_select %p32, %s34, %s25
      %p36 = scmp.ge.s32.totalorder %s35, 2
      %s37 = scalar_select %p36, 0, %s35
      %s38 = ssub.s32 %s25, %s37
      %p39 = scmp.eq.s32.totalorder %s38, 0
      %s41 = sadd.s32 %s40, 1
      %s42 = scalar_select %p39, %s40, %s41
      %p45 = pneg %p39
      %p46 = scmp.eq.s32.totalorder %s18, 1
      %p47 = por %p45, %p46
      %p48 = scmp.ne.s32.totalorder %s40, %s43
      %p49 = scmp.eq.s32.totalorder %s18, 0
      %p50 = por %p48, %p49
      %p51 = scmp.ne.s32.totalorder %s40, %s43
      %p52 = scmp.eq.s32.totalorder %s23, 1
      %p53 = por %p51, %p52
      %p54 = scmp.ne.s32.totalorder %s43, %s44
      %p55 = scmp.eq.s32.totalorder %s23, 0
      %p56 = por %p54, %p55
      %p57 = scmp.ne.s32.totalorder %s43, %s44
      %p58 = scmp.eq.s32.totalorder %s24, 1
      %p59 = por %p57, %p58
      %p61 = scmp.ne.s32.totalorder %s44, %s60
      %p62 = scmp.eq.s32.totalorder %s24, 0
      %p63 = por %p61, %p62
      %s64 = ssub.s32 %s26, %s33
      %p65 = scmp.eq.s32.totalorder %s64, 0
      %s67 = sadd.s32 %s66, 1
      %s68 = scalar_select %p65, %s66, %s67
      %p71 = pneg %p65
      %p72 = scmp.eq.s32.totalorder %s18, 1
      %p73 = por %p71, %p72
      %p74 = scmp.ne.s32.totalorder %s66, %s69
      %p75 = scmp.eq.s32.totalorder %s18, 0
      %p76 = por %p74, %p75
      %p77 = scmp.ne.s32.totalorder %s66, %s69
      %p78 = scmp.eq.s32.totalorder %s23, 1
      %p79 = por %p77, %p78
      %p80 = scmp.ne.s32.totalorder %s69, %s70
      %p81 = scmp.eq.s32.totalorder %s23, 0
      %p82 = por %p80, %p81
      %p83 = scmp.ne.s32.totalorder %s69, %s70
      %p84 = scmp.eq.s32.totalorder %s24, 1
      %p85 = por %p83, %p84
      %p87 = scmp.ne.s32.totalorder %s70, %s86
      %p88 = scmp.eq.s32.totalorder %s24, 0
      %p89 = por %p87, %p88
      %s90 = ssub.s32 %s26, %s33
      %p91 = scmp.eq.s32.totalorder %s90, 0
      %s93 = sadd.s32 %s92, 1
      %s94 = scalar_select %p91, %s92, %s93
      %p97 = pneg %p91
      %p98 = scmp.eq.s32.totalorder %s18, 1
      %p99 = por %p97, %p98
      %p100 = scmp.ne.s32.totalorder %s92, %s95
      %p101 = scmp.eq.s32.totalorder %s18, 0
      %p102 = por %p100, %p101
      %p103 = scmp.ne.s32.totalorder %s92, %s95
      %p104 = scmp.eq.s32.totalorder %s23, 1
      %p105 = por %p103, %p104
      %p106 = scmp.ne.s32.totalorder %s95, %s96
      %p107 = scmp.eq.s32.totalorder %s23, 0
      %p108 = por %p106, %p107
      %p109 = scmp.ne.s32.totalorder %s95, %s96
      %p110 = scmp.eq.s32.totalorder %s24, 1
      %p111 = por %p109, %p110
      %p113 = scmp.ne.s32.totalorder %s96, %s112
      %p114 = scmp.eq.s32.totalorder %s24, 0
      %p115 = por %p113, %p114
      %s116 = ssub.s32 %s26, %s33
      %p117 = scmp.eq.s32.totalorder %s116, 0
      %s119 = sadd.s32 %s118, 1
      %s120 = scalar_select %p117, %s118, %s119
      %p123 = pneg %p117
      %p124 = scmp.eq.s32.totalorder %s18, 1
      %p125 = por %p123, %p124
      %p126 = scmp.ne.s32.totalorder %s118, %s121
      %p127 = scmp.eq.s32.totalorder %s18, 0
      %p128 = por %p126, %p127
      %p129 = scmp.ne.s32.totalorder %s118, %s121
      %p130 = scmp.eq.s32.totalorder %s23, 1
      %p131 = por %p129, %p130
      %p132 = scmp.ne.s32.totalorder %s121, %s122
      %p133 = scmp.eq.s32.totalorder %s23, 0
      %p134 = por %p132, %p133
      %p135 = scmp.ne.s32.totalorder %s121, %s122
      %p136 = scmp.eq.s32.totalorder %s24, 1
      %p137 = por %p135, %p136
      %p139 = scmp.ne.s32.totalorder %s122, %s138
      %p140 = scmp.eq.s32.totalorder %s24, 0
      %p141 = por %p139, %p140
      %s143 = sadd.s32 %s142, 1
      %p146 = scmp.eq.s32.totalorder %s18, 1
      %p147 = scmp.ne.s32.totalorder %s142, %s144
      %p148 = scmp.eq.s32.totalorder %s18, 0
      %p149 = por %p147, %p148
      %p150 = scmp.ne.s32.totalorder %s142, %s144
      %p151 = scmp.eq.s32.totalorder %s23, 1
      %p152 = por %p150, %p151
      %p153 = scmp.ne.s32.totalorder %s144, %s145
      %p154 = scmp.eq.s32.totalorder %s23, 0
      %p155 = por %p153, %p154
      %p156 = scmp.ne.s32.totalorder %s144, %s145
      %p157 = scmp.eq.s32.totalorder %s24, 1
      %p158 = por %p156, %p157
      %p160 = scmp.ne.s32.totalorder %s145, %s159
      %p161 = scmp.eq.s32.totalorder %s24, 0
      %p162 = por %p160, %p161
      %s163 = ssub.s32 %s25, %s37
      %p164 = scmp.eq.s32.totalorder %s163, 0
      %s166 = sadd.s32 %s165, 1
      %s167 = scalar_select %p164, %s165, %s166
      %p170 = pneg %p164
      %p171 = scmp.eq.s32.totalorder %s18, 1
      %p172 = por %p170, %p171
      %p173 = scmp.ne.s32.totalorder %s165, %s168
      %p174 = scmp.eq.s32.totalorder %s18, 0
      %p175 = por %p173, %p174
      %p176 = scmp.ne.s32.totalorder %s165, %s168
      %p177 = scmp.eq.s32.totalorder %s23, 1
      %p178 = por %p176, %p177
      %p179 = scmp.ne.s32.totalorder %s168, %s169
      %p180 = scmp.eq.s32.totalorder %s23, 0
      %p181 = por %p179, %p180
      %p182 = scmp.ne.s32.totalorder %s168, %s169
      %p183 = scmp.eq.s32.totalorder %s24, 1
      %p184 = por %p182, %p183
      %p186 = scmp.ne.s32.totalorder %s169, %s185
      %p187 = scmp.eq.s32.totalorder %s24, 0
      %p188 = por %p186, %p187
      %p189 = scmp.le.s32.totalorder 1, %s18
      %p190 = scmp.lt.s32.totalorder %s18, 3
      %p191 = pnand %p189, %p190
      %p192 = pneg %p191
      // Predicated region
      $region9: #{tpu_custom_call.1} parent=5 // pred_check
        _
      $region10: #{tpu_custom_call.1} parent=5 // pred_check_branch
        %194 = sbr.rel (%p191) target = $region12
      $region11: #{tpu_custom_call.1} parent=5 // pred_region
        %s195 = ssub.s32 %s18, 1
        // Predicated region
        $region13: #{tpu_custom_call.1} parent=11 // pred_check
          %p196 = pneg %p82
        $region14: #{tpu_custom_call.1} parent=11 // pred_check_branch
          %198 = sbr.rel (%p196) target = $region16
        $region15: #{tpu_custom_call.1} parent=11 // pred_region
          %s199 = smul.u32 4, %s28
          %s201 = ssub.s32 2048, 2048
          %202 = vsyncadd [#allocation7], %s201
          %s203 = smul.addr %s199, 128
          %s204 = scalar_lea.hbm %s1, %s203
          %s205 = sshll.u32 [#allocation6], 4
          %s206 = int_to_ptr.vmem [resolvable:$true] %s205
          %211 = dma.hbm_to_vmem [thread:$0]  %s204, 2048, %s206, [#allocation7], 512, 512, 32
        $region16: #{tpu_custom_call.1} parent=11 // pred_fallthru
          _
        // Predicated region
        $region17: #{tpu_custom_call.1} parent=11 // pred_check
          %p212 = pneg %p108
        $region18: #{tpu_custom_call.1} parent=11 // pred_check_branch
          %214 = sbr.rel (%p212) target = $region20
        $region19: #{tpu_custom_call.1} parent=11 // pred_region
          %s215 = smul.u32 4, %s28
          %p216 = scmp.lt.s32.totalorder %s215, 3
          %s217 = scalar_select %p216, %s215, 3
          %s218 = scalar_lea.vmem %s2, %s217
          %s219 = smul.u32 4, %s28
        $region20: #{tpu_custom_call.1} parent=11 // pred_fallthru
          _
        // Predicated region
        $region21: #{tpu_custom_call.1} parent=11 // pred_check
          %p220 = pneg %p134
        $region22: #{tpu_custom_call.1} parent=11 // pred_check_branch
          %222 = sbr.rel (%p220) target = $region24
        $region23: #{tpu_custom_call.1} parent=11 // pred_region
          %s223 = smul.u32 64, %s28
          %s225 = ssub.s32 8192, 8192
          %226 = vsyncadd [#allocation7], %s225
          %s227 = smul.addr %s223, 128
          %s228 = scalar_lea.hbm %s3, %s227
          %s229 = sshll.u32 [#allocation8], 4
          %s230 = int_to_ptr.vmem [resolvable:$true] %s229
          %235 = dma.hbm_to_vmem [thread:$0]  %s228, 8192, %s230, [#allocation7], 128, 128, 8
        $region24: #{tpu_custom_call.1} parent=11 // pred_fallthru
          _
        // Predicated region
        $region25: #{tpu_custom_call.1} parent=11 // pred_check
          %p236 = pneg %p155
        $region26: #{tpu_custom_call.1} parent=11 // pred_check_branch
          %238 = sbr.rel (%p236) target = $region28
        $region27: #{tpu_custom_call.1} parent=11 // pred_region
          _
        $region28: #{tpu_custom_call.1} parent=11 // pred_fallthru
          _
      $region12: #{tpu_custom_call.1} parent=5 // pred_fallthru
        _
      %p239 = scmp.lt.s32.totalorder %s18, 2
      // Predicated region
      $region29: #{tpu_custom_call.1} parent=5 // pred_check
        %p240 = pneg %p239
      $region30: #{tpu_custom_call.1} parent=5 // pred_check_branch
        %242 = sbr.rel (%p240) target = $region32
      $region31: #{tpu_custom_call.1} parent=5 // pred_region
        // Predicated region
        $region33: #{tpu_custom_call.1} parent=31 // pred_check
          %p243 = pneg %p50
        $region34: #{tpu_custom_call.1} parent=31 // pred_check_branch
          %245 = sbr.rel (%p243) target = $region36
        $region35: #{tpu_custom_call.1} parent=31 // pred_region
          %s246 = sand.u32 %s40, 1
          %s247 = scalar_lea.sflag [#allocation4], %s246
          %s248 = sand.u32 %s40, 1
          %s249 = smul.addr %s248, 8
          %s250 = scalar_lea.vmem [#allocation3], %s249
          %s252 = ssub.s32 128, 128
          %253 = vsyncadd %s247, %s252
          %s254 = smul.addr %s25, 128
          %s255 = scalar_lea.hbm %s0, %s254
          %s257 = sshll.u32 %s250, 4
          %s258 = int_to_ptr.vmem [resolvable:$true] %s257
          %260 = dma.hbm_to_vmem [thread:$0]  %s255, 128, %s258, %s247
        $region36: #{tpu_custom_call.1} parent=31 // pred_fallthru
          _
      $region32: #{tpu_custom_call.1} parent=5 // pred_fallthru
        _
      %p261 = scmp.le.s32.totalorder 1, %s18
      %p262 = scmp.lt.s32.totalorder %s18, 3
      %p263 = pnand %p261, %p262
      %p264 = pneg %p263
      // Predicated region
      $region37: #{tpu_custom_call.1} parent=5 // pred_check
        _
      $region38: #{tpu_custom_call.1} parent=5 // pred_check_branch
        %266 = sbr.rel (%p263) target = $region40
      $region39: #{tpu_custom_call.1} parent=5 // pred_region
        %s267 = ssub.s32 %s18, 1
        %s268 = sand.u32 %s43, 1
        %s269 = scalar_lea.sflag [#allocation4], %s268
        %s270 = sand.u32 %s43, 1
        %s271 = smul.addr %s270, 8
        %s272 = scalar_lea.vmem [#allocation3], %s271
        // Predicated region
        $region41: #{tpu_custom_call.1} parent=39 // pred_check
          %p273 = pneg %p56
        $region42: #{tpu_custom_call.1} parent=39 // pred_check_branch
          %275 = sbr.rel (%p273) target = $region44
        $region43: #{tpu_custom_call.1} parent=39 // pred_region
          %276 = dma.done %s269, 128
        $region44: #{tpu_custom_call.1} parent=39 // pred_fallthru
          _
        // Predicated region
        $region45: #{tpu_custom_call.1} parent=39 // pred_check
          %p277 = pneg %p82
        $region46: #{tpu_custom_call.1} parent=39 // pred_check_branch
          %279 = sbr.rel (%p277) target = $region48
        $region47: #{tpu_custom_call.1} parent=39 // pred_region
          %280 = dma.done [#allocation7], 2048
        $region48: #{tpu_custom_call.1} parent=39 // pred_fallthru
          _
        // Predicated region
        $region49: #{tpu_custom_call.1} parent=39 // pred_check
          %p281 = pneg %p134
        $region50: #{tpu_custom_call.1} parent=39 // pred_check_branch
          %283 = sbr.rel (%p281) target = $region52
        $region51: #{tpu_custom_call.1} parent=39 // pred_region
          %284 = dma.done [#allocation7], 8192
        $region52: #{tpu_custom_call.1} parent=39 // pred_fallthru
          _
        %s285 = sand.u32 %s43, 1
        %s286 = scalar_lea.sflag [#allocation4], %s285
        %s287 = sand.u32 %s43, 1
        %s288 = smul.addr %s287, 8
        %s289 = scalar_lea.vmem [#allocation3], %s288
        %p290 = pneg %p56
        %p291 = pneg %p53
        %p292 = pneg %p82
        %p293 = pneg %p79
        %s294 = smul.u32 4, %s28
        %p295 = scmp.lt.s32.totalorder %s294, 3
        %s296 = scalar_select %p295, %s294, 3
        %s297 = scalar_lea.vmem %s2, %s296
        %p298 = pneg %p108
        %p299 = pneg %p105
        %p300 = pneg %p134
        %p301 = pneg %p131
        %p302 = pneg %p155
        %p303 = pneg %p152
        %p304 = pneg %p181
        %p305 = pneg %p178
        %s306 = sand.u32 %s168, 1
        %s307 = scalar_lea.sflag [#allocation5], %s306
        %s308 = sand.u32 %s168, 1
        %s309 = smul.addr %s308, 8
        %s310 = scalar_lea.vmem [#allocation9], %s309
        %s311 = smul.u32 4, %s28
        %s312 = smul.u32 4, %s28
        %p313 = scmp.lt.s32.totalorder %s312, 3
        %s314 = scalar_select %p313, %s312, 3
        %s315 = scalar_lea.vmem %s2, %s314
        %s316 = smul.u32 4, %s28
        %s317 = smul.u32 64, %s28
        %p318 = scmp.eq.s32.totalorder %s28, 0
        // Predicated region
        $region53: #{tpu_custom_call.1} parent=39 // pred_check
          %p319 = pneg %p318
        $region54: #{tpu_custom_call.1} parent=39 // pred_check_branch
          %321 = sbr.rel (%p319) target = $region56
        $region55: #{tpu_custom_call.1} parent=39 // pred_region
          %v322 = vld [vmem:[%s4] sm:$0x1]
          %v324 = vlaneseq
          %v325 = vshrl.u32 %v324, 7
          %v326 = vsub.s32 0, %v325
          %v327 = vrot.slane %v322, %v326
          %329 = vst [vmem:[#allocation2] sm:$0xff] %v327
        $region56: #{tpu_custom_call.1} parent=39 // pred_fallthru
          _
        %v330 = vld [vmem:[%s272] sm:$0xff]
        %v331 = vld [vmem:[#allocation6] sm:$0xff]
        %v332 = vld [vmem:[#allocation6 + $0x8] sm:$0xff]
        %v333 = vld [vmem:[#allocation6 + $0x10] sm:$0xff]
        %v334 = vld [vmem:[#allocation6 + $0x18] sm:$0xff]
        %v335 = vld [vmem:[#allocation6 + $0x20] sm:$0xff]
        %v336 = vld [vmem:[#allocation6 + $0x28] sm:$0xff]
        %v337 = vld [vmem:[#allocation6 + $0x30] sm:$0xff]
        %v338 = vld [vmem:[#allocation6 + $0x38] sm:$0xff]
        %v339 = vld [vmem:[#allocation6 + $0x40] sm:$0xff]
        %v340 = vld [vmem:[#allocation6 + $0x48] sm:$0xff]
        %v341 = vld [vmem:[#allocation6 + $0x50] sm:$0xff]
        %v342 = vld [vmem:[#allocation6 + $0x58] sm:$0xff]
        %v343 = vld [vmem:[#allocation6 + $0x60] sm:$0xff]
        %v344 = vld [vmem:[#allocation6 + $0x68] sm:$0xff]
        %v345 = vld [vmem:[#allocation6 + $0x70] sm:$0xff]
        %v346 = vld [vmem:[#allocation6 + $0x78] sm:$0xff]
        %v347 = vld [vmem:[%s315] sm:$0xf]
        %v349 = vlaneseq
        %v350 = vshrl.u32 %v349, 7
        %v351 = vsub.s32 0, %v350
        %v352 = vrot.slane %v347, %v351
        %v353 = vlaneseq
        %v354 = vshrl.u32 %v353, 7
        %v355 = vsub.s32 1, %v354
        %v356 = vrot.slane %v347, %v355
        %v357 = vlaneseq
        %v358 = vshrl.u32 %v357, 7
        %v359 = vsub.s32 2, %v358
        %v360 = vrot.slane %v347, %v359
        %v361 = vlaneseq
        %v362 = vshrl.u32 %v361, 7
        %v363 = vsub.s32 3, %v362
        %v364 = vrot.slane %v347, %v363
        %vm369 = vcmask 261120
        %v371 = vsel %vm369, %v330, 0
        %373 = vmatprep.subr.mxu0 %v332
        %374 = vmatpush1.msra.mxu0 %v331
        %375 = vmatprep.subr.mxu0 %v336
        %376 = vmatpush1.msra.mxu0 %v335
        %377 = vmatprep.subr.mxu0 %v340
        %378 = vmatpush1.msra.mxu0 %v339
        %379 = vmatprep.subr.mxu0 %v344
        %380 = vmatpush1.msra.mxu0 %v343
        %381 = vmatprep.subr.mxu0 0.0
        %382 = vmatpush1.msra.mxu0 0.0
        %383 = vmatprep.subr.mxu0 0.0
        %384 = vmatpush1.msra.mxu0 0.0
        %385 = vmatprep.subr.mxu0 0.0
        %386 = vmatpush1.msra.mxu0 0.0
        %387 = vmatprep.subr.mxu0 0.0
        %388 = vmatpush1.msra.mxu0 0.0
        %389 = vmatprep.subr.mxu0 0.0
        %390 = vmatpush1.msra.mxu0 0.0
        %391 = vmatprep.subr.mxu0 0.0
        %392 = vmatpush1.msra.mxu0 0.0
        %393 = vmatprep.subr.mxu0 0.0
        %394 = vmatpush1.msra.mxu0 0.0
        %395 = vmatprep.subr.mxu0 0.0
        %396 = vmatpush1.msra.mxu0 0.0
        %397 = vmatprep.subr.mxu0 0.0
        %398 = vmatpush1.msra.mxu0 0.0
        %399 = vmatprep.subr.mxu0 0.0
        %400 = vmatpush1.msra.mxu0 0.0
        %401 = vmatprep.subr.mxu0 0.0
        %402 = vmatpush1.msra.mxu0 0.0
        %403 = vmatprep.subr.mxu0 0.0
        %404 = vmatpush1.msra.mxu0 0.0
        %405 = vmatprep.subr.mxu0 0.0
        %406 = vmatpush1.msra.mxu0 0.0
        %407 = vmatprep.subr.mxu0 0.0
        %408 = vmatpush1.msra.mxu0 0.0
        %409 = vmatprep.subr.mxu0 0.0
        %410 = vmatpush1.msra.mxu0 0.0
        %411 = vmatprep.subr.mxu0 0.0
        %412 = vmatpush1.msra.mxu0 0.0
        %413 = vmatprep.subr.mxu0 0.0
        %414 = vmatpush1.msra.mxu0 0.0
        %415 = vmatprep.subr.mxu0 0.0
        %416 = vmatpush1.msra.mxu0 0.0
        %417 = vmatprep.subr.mxu0 0.0
        %418 = vmatpush1.msra.mxu0 0.0
        %419 = vmatprep.subr.mxu0 0.0
        %420 = vmatpush1.msra.mxu0 0.0
        %421 = vmatprep.subr.mxu0 0.0
        %422 = vmatpush1.msra.mxu0 0.0
        %423 = vmatprep.subr.mxu0 0.0
        %424 = vmatpush1.msra.mxu0 0.0
        %425 = vmatprep.subr.mxu0 0.0
        %426 = vmatpush1.msra.mxu0 0.0
        %427 = vmatprep.subr.mxu0 0.0
        %428 = vmatpush1.msra.mxu0 0.0
        %429 = vmatprep.subr.mxu0 0.0
        %430 = vmatpush1.msra.mxu0 0.0
        %431 = vmatprep.subr.mxu0 0.0
        %432 = vmatpush1.msra.mxu0 0.0
        %433 = vmatprep.subr.mxu0 0.0
        %434 = vmatpush1.msra.mxu0 0.0
        %435 = vmatprep.subr.mxu0 0.0
        %436 = vmatpush1.msra.mxu0 0.0
        %437 = vmatprep.mubr.f32.mxu0 0.0
        %438 = vmatmul.mubr.f32.gmra.mrb[0].mxu0 %v371
        %v439 = vpop.f32.mrb[0].mxu0
        %v440 = vadd.f32 %v352, %v439
        %v441 = vpop.f32.mrb[0].mxu0
        %v442 = vadd.f32 %v356, %v441
        %443 = vdwg.mxu0
        %444 = vmatprep.subr.mxu0 %v334
        %445 = vmatpush1.msra.mxu0 %v333
        %446 = vmatprep.subr.mxu0 %v338
        %447 = vmatpush1.msra.mxu0 %v337
        %448 = vmatprep.subr.mxu0 %v342
        %449 = vmatpush1.msra.mxu0 %v341
        %450 = vmatprep.subr.mxu0 %v346
        %451 = vmatpush1.msra.mxu0 %v345
        %452 = vmatprep.subr.mxu0 0.0
        %453 = vmatpush1.msra.mxu0 0.0
        %454 = vmatprep.subr.mxu0 0.0
        %455 = vmatpush1.msra.mxu0 0.0
        %456 = vmatprep.subr.mxu0 0.0
        %457 = vmatpush1.msra.mxu0 0.0
        %458 = vmatprep.subr.mxu0 0.0
        %459 = vmatpush1.msra.mxu0 0.0
        %460 = vmatprep.subr.mxu0 0.0
        %461 = vmatpush1.msra.mxu0 0.0
        %462 = vmatprep.subr.mxu0 0.0
        %463 = vmatpush1.msra.mxu0 0.0
        %464 = vmatprep.subr.mxu0 0.0
        %465 = vmatpush1.msra.mxu0 0.0
        %466 = vmatprep.subr.mxu0 0.0
        %467 = vmatpush1.msra.mxu0 0.0
        %468 = vmatprep.subr.mxu0 0.0
        %469 = vmatpush1.msra.mxu0 0.0
        %470 = vmatprep.subr.mxu0 0.0
        %471 = vmatpush1.msra.mxu0 0.0
        %472 = vmatprep.subr.mxu0 0.0
        %473 = vmatpush1.msra.mxu0 0.0
        %474 = vmatprep.subr.mxu0 0.0
        %475 = vmatpush1.msra.mxu0 0.0
        %476 = vmatprep.subr.mxu0 0.0
        %477 = vmatpush1.msra.mxu0 0.0
        %478 = vmatprep.subr.mxu0 0.0
        %479 = vmatpush1.msra.mxu0 0.0
        %480 = vmatprep.subr.mxu0 0.0
        %481 = vmatpush1.msra.mxu0 0.0
        %482 = vmatprep.subr.mxu0 0.0
        %483 = vmatpush1.msra.mxu0 0.0
        %484 = vmatprep.subr.mxu0 0.0
        %485 = vmatpush1.msra.mxu0 0.0
        %486 = vmatprep.subr.mxu0 0.0
        %487 = vmatpush1.msra.mxu0 0.0
        %488 = vmatprep.subr.mxu0 0.0
        %489 = vmatpush1.msra.mxu0 0.0
        %490 = vmatprep.subr.mxu0 0.0
        %491 = vmatpush1.msra.mxu0 0.0
        %492 = vmatprep.subr.mxu0 0.0
        %493 = vmatpush1.msra.mxu0 0.0
        %494 = vmatprep.subr.mxu0 0.0
        %495 = vmatpush1.msra.mxu0 0.0
        %496 = vmatprep.subr.mxu0 0.0
        %497 = vmatpush1.msra.mxu0 0.0
        %498 = vmatprep.subr.mxu0 0.0
        %499 = vmatpush1.msra.mxu0 0.0
        %500 = vmatprep.subr.mxu0 0.0
        %501 = vmatpush1.msra.mxu0 0.0
        %502 = vmatprep.subr.mxu0 0.0
        %503 = vmatpush1.msra.mxu0 0.0
        %504 = vmatprep.subr.mxu0 0.0
        %505 = vmatpush1.msra.mxu0 0.0
        %506 = vmatprep.subr.mxu0 0.0
        %507 = vmatpush1.msra.mxu0 0.0
        %508 = vmatprep.mubr.f32.mxu0 0.0
        %509 = vmatmul.mubr.f32.gmra.mrb[0].mxu0 %v371
        %v510 = vpop.f32.mrb[0].mxu0
        %v511 = vadd.f32 %v360, %v510
        %v512 = vpop.f32.mrb[0].mxu0
        %v513 = vadd.f32 %v364, %v512
        %514 = vdwg.mxu0
        %v515 = vmax.f32 %v440, 0.0
        %v516 = vmax.f32 %v442, 0.0
        %v517 = vmax.f32 %v511, 0.0
        %v518 = vmax.f32 %v513, 0.0
        %v519 = vld [vmem:[#allocation2] sm:$0xff]
        %v520 = vld [vmem:[#allocation8] sm:$0xff]
        %v521 = vld [vmem:[#allocation8 + $0x8] sm:$0xff]
        %v522 = vld [vmem:[#allocation8 + $0x10] sm:$0xff]
        %v523 = vld [vmem:[#allocation8 + $0x18] sm:$0xff]
        %v524 = vld [vmem:[#allocation8 + $0x20] sm:$0xff]
        %v525 = vld [vmem:[#allocation8 + $0x28] sm:$0xff]
        %v526 = vld [vmem:[#allocation8 + $0x30] sm:$0xff]
        %v527 = vld [vmem:[#allocation8 + $0x38] sm:$0xff]
        %v528 = vld [vmem:[#allocation8 + $0x40] sm:$0xff]
        %v529 = vld [vmem:[#allocation8 + $0x48] sm:$0xff]
        %v530 = vld [vmem:[#allocation8 + $0x50] sm:$0xff]
        %v531 = vld [vmem:[#allocation8 + $0x58] sm:$0xff]
        %v532 = vld [vmem:[#allocation8 + $0x60] sm:$0xff]
        %v533 = vld [vmem:[#allocation8 + $0x68] sm:$0xff]
        %v534 = vld [vmem:[#allocation8 + $0x70] sm:$0xff]
        %v535 = vld [vmem:[#allocation8 + $0x78] sm:$0xff]
        %v536 = vld [vmem:[#allocation8 + $0x80] sm:$0xff]
        %v537 = vld [vmem:[#allocation8 + $0x88] sm:$0xff]
        %v538 = vld [vmem:[#allocation8 + $0x90] sm:$0xff]
        %v539 = vld [vmem:[#allocation8 + $0x98] sm:$0xff]
        %v540 = vld [vmem:[#allocation8 + $0xa0] sm:$0xff]
        %v541 = vld [vmem:[#allocation8 + $0xa8] sm:$0xff]
        %v542 = vld [vmem:[#allocation8 + $0xb0] sm:$0xff]
        %v543 = vld [vmem:[#allocation8 + $0xb8] sm:$0xff]
        %v544 = vld [vmem:[#allocation8 + $0xc0] sm:$0xff]
        %v545 = vld [vmem:[#allocation8 + $0xc8] sm:$0xff]
        %v546 = vld [vmem:[#allocation8 + $0xd0] sm:$0xff]
        %v547 = vld [vmem:[#allocation8 + $0xd8] sm:$0xff]
        %v548 = vld [vmem:[#allocation8 + $0xe0] sm:$0xff]
        %v549 = vld [vmem:[#allocation8 + $0xe8] sm:$0xff]
        %v550 = vld [vmem:[#allocation8 + $0xf0] sm:$0xff]
        %v551 = vld [vmem:[#allocation8 + $0xf8] sm:$0xff]
        %v552 = vld [vmem:[#allocation8 + $0x100] sm:$0xff]
        %v553 = vld [vmem:[#allocation8 + $0x108] sm:$0xff]
        %v554 = vld [vmem:[#allocation8 + $0x110] sm:$0xff]
        %v555 = vld [vmem:[#allocation8 + $0x118] sm:$0xff]
        %v556 = vld [vmem:[#allocation8 + $0x120] sm:$0xff]
        %v557 = vld [vmem:[#allocation8 + $0x128] sm:$0xff]
        %v558 = vld [vmem:[#allocation8 + $0x130] sm:$0xff]
        %v559 = vld [vmem:[#allocation8 + $0x138] sm:$0xff]
        %v560 = vld [vmem:[#allocation8 + $0x140] sm:$0xff]
        %v561 = vld [vmem:[#allocation8 + $0x148] sm:$0xff]
        %v562 = vld [vmem:[#allocation8 + $0x150] sm:$0xff]
        %v563 = vld [vmem:[#allocation8 + $0x158] sm:$0xff]
        %v564 = vld [vmem:[#allocation8 + $0x160] sm:$0xff]
        %v565 = vld [vmem:[#allocation8 + $0x168] sm:$0xff]
        %v566 = vld [vmem:[#allocation8 + $0x170] sm:$0xff]
        %v567 = vld [vmem:[#allocation8 + $0x178] sm:$0xff]
        %v568 = vld [vmem:[#allocation8 + $0x180] sm:$0xff]
        %v569 = vld [vmem:[#allocation8 + $0x188] sm:$0xff]
        %v570 = vld [vmem:[#allocation8 + $0x190] sm:$0xff]
        %v571 = vld [vmem:[#allocation8 + $0x198] sm:$0xff]
        %v572 = vld [vmem:[#allocation8 + $0x1a0] sm:$0xff]
        %v573 = vld [vmem:[#allocation8 + $0x1a8] sm:$0xff]
        %v574 = vld [vmem:[#allocation8 + $0x1b0] sm:$0xff]
        %v575 = vld [vmem:[#allocation8 + $0x1b8] sm:$0xff]
        %v576 = vld [vmem:[#allocation8 + $0x1c0] sm:$0xff]
        %v577 = vld [vmem:[#allocation8 + $0x1c8] sm:$0xff]
        %v578 = vld [vmem:[#allocation8 + $0x1d0] sm:$0xff]
        %v579 = vld [vmem:[#allocation8 + $0x1d8] sm:$0xff]
        %v580 = vld [vmem:[#allocation8 + $0x1e0] sm:$0xff]
        %v581 = vld [vmem:[#allocation8 + $0x1e8] sm:$0xff]
        %v582 = vld [vmem:[#allocation8 + $0x1f0] sm:$0xff]
        %v583 = vld [vmem:[#allocation8 + $0x1f8] sm:$0xff]
        %584 = vmatprep.subr.mxu0 0.0
        %585 = vmatpush1.msra.mxu0 %v520
        %586 = vmatprep.subr.mxu0 0.0
        %587 = vmatpush1.msra.mxu0 %v521
        %588 = vmatprep.subr.mxu0 0.0
        %589 = vmatpush1.msra.mxu0 %v522
        %590 = vmatprep.subr.mxu0 0.0
        %591 = vmatpush1.msra.mxu0 %v523
        %592 = vmatprep.subr.mxu0 0.0
        %593 = vmatpush1.msra.mxu0 %v524
        %594 = vmatprep.subr.mxu0 0.0
        %595 = vmatpush1.msra.mxu0 %v525
        %596 = vmatprep.subr.mxu0 0.0
        %597 = vmatpush1.msra.mxu0 %v526
        %598 = vmatprep.subr.mxu0 0.0
        %599 = vmatpush1.msra.mxu0 %v527
        %600 = vmatprep.subr.mxu0 0.0
        %601 = vmatpush1.msra.mxu0 %v528
        %602 = vmatprep.subr.mxu0 0.0
        %603 = vmatpush1.msra.mxu0 %v529
        %604 = vmatprep.subr.mxu0 0.0
        %605 = vmatpush1.msra.mxu0 %v530
        %606 = vmatprep.subr.mxu0 0.0
        %607 = vmatpush1.msra.mxu0 %v531
        %608 = vmatprep.subr.mxu0 0.0
        %609 = vmatpush1.msra.mxu0 %v532
        %610 = vmatprep.subr.mxu0 0.0
        %611 = vmatpush1.msra.mxu0 %v533
        %612 = vmatprep.subr.mxu0 0.0
        %613 = vmatpush1.msra.mxu0 %v534
        %614 = vmatprep.subr.mxu0 0.0
        %615 = vmatpush1.msra.mxu0 %v535
        %616 = vmatprep.subr.mxu0 0.0
        %617 = vmatpush1.msra.mxu0 %v536
        %618 = vmatprep.subr.mxu0 0.0
        %619 = vmatpush1.msra.mxu0 %v537
        %620 = vmatprep.subr.mxu0 0.0
        %621 = vmatpush1.msra.mxu0 %v538
        %622 = vmatprep.subr.mxu0 0.0
        %623 = vmatpush1.msra.mxu0 %v539
        %624 = vmatprep.subr.mxu0 0.0
        %625 = vmatpush1.msra.mxu0 %v540
        %626 = vmatprep.subr.mxu0 0.0
        %627 = vmatpush1.msra.mxu0 %v541
        %628 = vmatprep.subr.mxu0 0.0
        %629 = vmatpush1.msra.mxu0 %v542
        %630 = vmatprep.subr.mxu0 0.0
        %631 = vmatpush1.msra.mxu0 %v543
        %632 = vmatprep.subr.mxu0 0.0
        %633 = vmatpush1.msra.mxu0 %v544
        %634 = vmatprep.subr.mxu0 0.0
        %635 = vmatpush1.msra.mxu0 %v545
        %636 = vmatprep.subr.mxu0 0.0
        %637 = vmatpush1.msra.mxu0 %v546
        %638 = vmatprep.subr.mxu0 0.0
        %639 = vmatpush1.msra.mxu0 %v547
        %640 = vmatprep.subr.mxu0 0.0
        %641 = vmatpush1.msra.mxu0 %v548
        %642 = vmatprep.subr.mxu0 0.0
        %643 = vmatpush1.msra.mxu0 %v549
        %644 = vmatprep.subr.mxu0 0.0
        %645 = vmatpush1.msra.mxu0 %v550
        %646 = vmatprep.subr.mxu0 0.0
        %647 = vmatpush1.msra.mxu0 %v551
        %648 = vmatprep.mubr.f32.mxu0 %v516
        %649 = vmatmul.mubr.f32.gmra.mrb[0].mxu0 %v515
        %v650 = vpop.f32.mrb[0].mxu0
        %v651 = vadd.f32 0.0, %v650
        %v652 = vpop.f32.mrb[0].mxu0
        %653 = vdwg.mxu0
        %654 = vmatprep.subr.mxu0 0.0
        %655 = vmatpush1.msra.mxu0 %v552
        %656 = vmatprep.subr.mxu0 0.0
        %657 = vmatpush1.msra.mxu0 %v553
        %658 = vmatprep.subr.mxu0 0.0
        %659 = vmatpush1.msra.mxu0 %v554
        %660 = vmatprep.subr.mxu0 0.0
        %661 = vmatpush1.msra.mxu0 %v555
        %662 = vmatprep.subr.mxu0 0.0
        %663 = vmatpush1.msra.mxu0 %v556
        %664 = vmatprep.subr.mxu0 0.0
        %665 = vmatpush1.msra.mxu0 %v557
        %666 = vmatprep.subr.mxu0 0.0
        %667 = vmatpush1.msra.mxu0 %v558
        %668 = vmatprep.subr.mxu0 0.0
        %669 = vmatpush1.msra.mxu0 %v559
        %670 = vmatprep.subr.mxu0 0.0
        %671 = vmatpush1.msra.mxu0 %v560
        %672 = vmatprep.subr.mxu0 0.0
        %673 = vmatpush1.msra.mxu0 %v561
        %674 = vmatprep.subr.mxu0 0.0
        %675 = vmatpush1.msra.mxu0 %v562
        %676 = vmatprep.subr.mxu0 0.0
        %677 = vmatpush1.msra.mxu0 %v563
        %678 = vmatprep.subr.mxu0 0.0
        %679 = vmatpush1.msra.mxu0 %v564
        %680 = vmatprep.subr.mxu0 0.0
        %681 = vmatpush1.msra.mxu0 %v565
        %682 = vmatprep.subr.mxu0 0.0
        %683 = vmatpush1.msra.mxu0 %v566
        %684 = vmatprep.subr.mxu0 0.0
        %685 = vmatpush1.msra.mxu0 %v567
        %686 = vmatprep.subr.mxu0 0.0
        %687 = vmatpush1.msra.mxu0 %v568
        %688 = vmatprep.subr.mxu0 0.0
        %689 = vmatpush1.msra.mxu0 %v569
        %690 = vmatprep.subr.mxu0 0.0
        %691 = vmatpush1.msra.mxu0 %v570
        %692 = vmatprep.subr.mxu0 0.0
        %693 = vmatpush1.msra.mxu0 %v571
        %694 = vmatprep.subr.mxu0 0.0
        %695 = vmatpush1.msra.mxu0 %v572
        %696 = vmatprep.subr.mxu0 0.0
        %697 = vmatpush1.msra.mxu0 %v573
        %698 = vmatprep.subr.mxu0 0.0
        %699 = vmatpush1.msra.mxu0 %v574
        %700 = vmatprep.subr.mxu0 0.0
        %701 = vmatpush1.msra.mxu0 %v575
        %702 = vmatprep.subr.mxu0 0.0
        %703 = vmatpush1.msra.mxu0 %v576
        %704 = vmatprep.subr.mxu0 0.0
        %705 = vmatpush1.msra.mxu0 %v577
        %706 = vmatprep.subr.mxu0 0.0
        %707 = vmatpush1.msra.mxu0 %v578
        %708 = vmatprep.subr.mxu0 0.0
        %709 = vmatpush1.msra.mxu0 %v579
        %710 = vmatprep.subr.mxu0 0.0
        %711 = vmatpush1.msra.mxu0 %v580
        %712 = vmatprep.subr.mxu0 0.0
        %713 = vmatpush1.msra.mxu0 %v581
        %714 = vmatprep.subr.mxu0 0.0
        %715 = vmatpush1.msra.mxu0 %v582
        %716 = vmatprep.subr.mxu0 0.0
        %717 = vmatpush1.msra.mxu0 %v583
        %718 = vmatprep.mubr.f32.mxu0 %v518
        %719 = vmatmul.mubr.f32.gmra.mrb[0].mxu0 %v517
        %v720 = vpop.f32.mrb[0].mxu0
        %v721 = vadd.f32 %v651, %v720
        %v722 = vpop.f32.mrb[0].mxu0
        %723 = vdwg.mxu0
        %v724 = vadd.f32 %v519, %v721
        %725 = vst [vmem:[#allocation2] sm:$0xff] %v724
        // Predicated region
        $region57: #{tpu_custom_call.1} parent=39 // pred_check
          %p726 = pneg %p318
        $region58: #{tpu_custom_call.1} parent=39 // pred_check_branch
          %728 = sbr.rel (%p726) target = $region60
        $region59: #{tpu_custom_call.1} parent=39 // pred_region
          %v729 = vld [vmem:[#allocation2] sm:$0xff]
          %730 = vst [vmem:[%s310] sm:$0xff] %v729
        $region60: #{tpu_custom_call.1} parent=39 // pred_fallthru
          _
        %s731 = sand.u32 %s168, 1
        %s732 = scalar_lea.sflag [#allocation5], %s731
        %s733 = sand.u32 %s168, 1
        %s734 = smul.addr %s733, 8
        %s735 = scalar_lea.vmem [#allocation9], %s734
        // Predicated region
        $region61: #{tpu_custom_call.1} parent=39 // pred_check
          %p736 = pneg %p178
        $region62: #{tpu_custom_call.1} parent=39 // pred_check_branch
          %738 = sbr.rel (%p736) target = $region64
        $region63: #{tpu_custom_call.1} parent=39 // pred_region
          %s740 = ssub.s32 128, 128
          %741 = vsyncadd %s732, %s740
          %s742 = smul.addr %s27, 128
          %s743 = scalar_lea.hbm %s5, %s742
          %s745 = sshll.u32 %s735, 4
          %s746 = int_to_ptr.vmem [resolvable:$true] %s745
          %748 = dma.vmem_to_hbm [thread:$0]  %s746, 128, %s743, %s732
        $region64: #{tpu_custom_call.1} parent=39 // pred_fallthru
          _
      $region40: #{tpu_custom_call.1} parent=5 // pred_fallthru
        _
      %p749 = scmp.le.s32.totalorder 2, %s18
      // Predicated region
      $region65: #{tpu_custom_call.1} parent=5 // pred_check
        %p750 = pneg %p749
      $region66: #{tpu_custom_call.1} parent=5 // pred_check_branch
        %752 = sbr.rel (%p750) target = $region68
      $region67: #{tpu_custom_call.1} parent=5 // pred_region
        %s753 = ssub.s32 %s18, 2
        // Predicated region
        $region69: #{tpu_custom_call.1} parent=67 // pred_check
          %p754 = pneg %p184
        $region70: #{tpu_custom_call.1} parent=67 // pred_check_branch
          %756 = sbr.rel (%p754) target = $region72
        $region71: #{tpu_custom_call.1} parent=67 // pred_region
          %s757 = sand.u32 %s169, 1
          %s758 = scalar_lea.sflag [#allocation5], %s757
          %s759 = sand.u32 %s169, 1
          %s760 = smul.addr %s759, 8
          %s761 = scalar_lea.vmem [#allocation9], %s760
          %762 = dma.done %s758, 128
        $region72: #{tpu_custom_call.1} parent=67 // pred_fallthru
          _
      $region68: #{tpu_custom_call.1} parent=5 // pred_fallthru
        _
    $region6: #{tpu_custom_call.1} parent=1 // loop_footer
      %s22 = sadd.s32 1, %s18
    $region7: #{tpu_custom_call.1} parent=1 // loop_footer_branch
      %17 = sbr.rel target = $region3
    $region8: #{tpu_custom_call.1} parent=1 // loop_exit
      _
    %763 = vsyncpa [#allocation4], 1
    %s764 = scalar_lea.sflag [#allocation4], 1
    %765 = vsyncpa %s764, 1
    %766 = vsyncpa [#allocation7], 1
    %767 = vsyncpa [#allocation5], 1
    %s768 = scalar_lea.sflag [#allocation5], 1
    %769 = vsyncpa %s768, 1

</llo_original>
